<compile_context>
chip_gen: v7x
topology: tpu7x:2x2x1
jax: 0.10.0
libtpu: 0.0.40
codegen_flags: <defaults>
</compile_context>

<pallas_src>
import functools

import jax
import jax.numpy as jnp
from jax.experimental import pallas as pl
from jax.experimental.pallas import tpu as pltpu


def _round_up(n, m):
    return ((n + m - 1) // m) * m


def _largest_divisor_tile(total, max_tile):
    """Largest multiple of 128 that divides `total` (a multiple of 128) and
    is <= max_tile (>= 128)."""
    m = total // 128
    cap = max(1, max_tile // 128)
    best = 1
    for d in range(1, m + 1):
        if m % d == 0 and d <= cap:
            best = d
    return 128 * best


def _simple_dnn_kernel(x_ref, w1_ref, b1_ref, w2_ref, b2_ref, o_ref, acc_ref):
    # Grid = (batch tiles, hidden (reduction) tiles).
    # x_ref:  (tile_b, In_p)   bf16
    # w1_ref: (In_p, tile_h)   bf16     b1_ref: (1, tile_h)  f32
    # w2_ref: (tile_h, Out_p)  bf16     b2_ref: (1, Out_p)   f32
    # o_ref:  (tile_b, Out_p)  out_dt   acc_ref: (tile_b, Out_p) f32 scratch
    k = pl.program_id(1)

    @pl.when(k == 0)
    def _():
        acc_ref[...] = jnp.zeros_like(acc_ref)

    # fc1 chunk on MXU (f32 accumulate), bias + ReLU on VPU in f32.
    h = jnp.dot(x_ref[...], w1_ref[...], preferred_element_type=jnp.float32)
    h = jnp.maximum(h + b1_ref[...], 0.0)

    # fc2 partial product, accumulated in f32 scratch.
    acc_ref[...] += jnp.dot(h.astype(jnp.bfloat16), w2_ref[...],
                            preferred_element_type=jnp.float32)

    @pl.when(k == pl.num_programs(1) - 1)
    def _():
        o_ref[...] = (acc_ref[...] + b2_ref[...]).astype(o_ref.dtype)


def prepare_simple_dnn_params(w1, b1, w2, b2):
    """One-time (model init) weight preprocessing: pad lane dims to multiples
    of 128, cast matmul operands to bf16, biases to f32.

    w1: (In, H), b1: (H,), w2: (H, Out), b2: (Out,)
    Returns (params_dict, (In, H, Out)).

    Correctness invariant: padded lanes of b1/W1/W2/b2 are zero so padded
    hidden units stay 0 after ReLU and contribute nothing to the output.
    """
    In, H = w1.shape
    Out = w2.shape[1]
    In_p, H_p, Out_p = (_round_up(d, 128) for d in (In, H, Out))

    w1_p = jnp.zeros((In_p, H_p), jnp.bfloat16).at[:In, :H].set(
        w1.astype(jnp.bfloat16))
    b1_p = jnp.zeros((1, H_p), jnp.float32).at[0, :H].set(
        b1.astype(jnp.float32))
    w2_p = jnp.zeros((H_p, Out_p), jnp.bfloat16).at[:H, :Out].set(
        w2.astype(jnp.bfloat16))
    b2_p = jnp.zeros((1, Out_p), jnp.float32).at[0, :Out].set(
        b2.astype(jnp.float32))

    params = {"w1": w1_p, "b1": b1_p, "w2": w2_p, "b2": b2_p}
    return params, (In, H, Out)


@functools.partial(jax.jit,
                   static_argnames=("dims", "tile_b", "tile_h", "out_dtype"))
def simple_dnn_forward(x, params, dims, *, tile_b=256, tile_h=512,
                       out_dtype=None):
    """x: (B, In) f32/bf16; params from prepare_simple_dnn_params."""
    In, H, Out = dims
    B = x.shape[0]
    w1_p, b1_p, w2_p, b2_p = params["w1"], params["b1"], params["w2"], params["b2"]
    In_p, H_p = w1_p.shape
    Out_p = w2_p.shape[1]
    out_dt = jnp.dtype(out_dtype) if out_dtype is not None else jnp.dtype(x.dtype)

    # ---- tile selection --------------------------------------------------
    B8 = _round_up(B, 8)
    tile_b = min(tile_b, B8)
    if B8 >= 16:
        # >= 2 batch grid steps when batch allows (v7x dual-TC sharding).
        tile_b = min(tile_b, max(8, _round_up(B8 // 2, 8)))
    tile_b = _round_up(tile_b, 8)

    tile_h = _largest_divisor_tile(H_p, min(_round_up(tile_h, 128), H_p))

    # ---- VMEM budget guard (v7x has only 64 MiB physical VMEM) ------------
    def vmem_need(tb, th):
        n_h_ = H_p // th
        nbuf = 1 if n_h_ == 1 else 2
        return (2 * tb * In_p * 2                                   # x tile (bf16, 2 bufs)
                + nbuf * (In_p * th * 2 + th * 4 + th * Out_p * 2)  # w1, b1, w2
                + Out_p * 4                                         # b2 (single buffer)
                + 2 * tb * Out_p * out_dt.itemsize                  # out tile (2 bufs)
                + tb * Out_p * 4                                    # f32 accumulator
                + tb * th * 4)                                      # live h chunk

    budget = 48 << 20  # stay well under v7x's 64 MiB
    while vmem_need(tile_b, tile_h) > budget and tile_h > 128:
        tile_h = _largest_divisor_tile(H_p, tile_h - 128)
    while vmem_need(tile_b, tile_h) > budget and tile_b > 8:
        tile_b = max(8, _round_up(tile_b // 2, 8))

    B_p = _round_up(B, tile_b)
    n_b = B_p // tile_b
    n_h = H_p // tile_h

    vmem_limit = int(min(max(2 * vmem_need(tile_b, tile_h), 32 << 20), 64 << 20))

    # ---- x: pad only when strictly needed ---------------------------------
    if (B_p != B) or (In_p != In):
        x_p = jnp.zeros((B_p, In_p), jnp.bfloat16).at[:B, :In].set(
            x.astype(jnp.bfloat16))
    else:
        x_p = x.astype(jnp.bfloat16)

    # ---- BlockSpecs --------------------------------------------------------
    def spec(shape, index_map, single_buffer=False):
        if single_buffer:
            # Constant block: no re-DMA after step 0, so one buffer suffices.
            return pl.BlockSpec(shape, index_map, pipeline_mode=pl.Buffered(1))
        return pl.BlockSpec(shape, index_map)

    weights_const = (n_h == 1)
    in_specs = [
        spec((tile_b, In_p), lambda i, k: (i, 0)),                       # x
        spec((In_p, tile_h), lambda i, k: (0, k), weights_const),        # W1
        spec((1, tile_h), lambda i, k: (0, k), weights_const),           # b1
        spec((tile_h, Out_p), lambda i, k: (k, 0), weights_const),       # W2
        spec((1, Out_p), lambda i, k: (0, 0), True),                     # b2
    ]
    out_spec = pl.BlockSpec((tile_b, Out_p), lambda i, k: (i, 0))

    flops = 2 * B * (In * H + H * Out)
    bytes_accessed = (x_p.size * 2 + w1_p.size * 2 + b1_p.size * 4
                      + w2_p.size * 2 + b2_p.size * 4
                      + B_p * Out_p * out_dt.itemsize)
    cost = pl.CostEstimate(flops=flops, transcendentals=0,
                           bytes_accessed=bytes_accessed)

    out_p = pl.pallas_call(
        _simple_dnn_kernel,
        out_shape=jax.ShapeDtypeStruct((B_p, Out_p), out_dt),
        grid=(n_b, n_h),
        in_specs=in_specs,
        out_specs=out_spec,
        scratch_shapes=[pltpu.VMEM((tile_b, Out_p), jnp.float32)],
        compiler_params=pltpu.CompilerParams(
            dimension_semantics=("parallel", "arbitrary"),
            vmem_limit_bytes=vmem_limit,
        ),
        cost_estimate=cost,
    )(x_p, w1_p, b1_p, w2_p, b2_p)

    # Slice away batch / lane padding.
    return out_p[:B, :Out]


def reference_forward(x, w1, b1, w2, b2):
    h = jnp.maximum(x @ w1 + b1, 0.0)
    return h @ w2 + b2


def _make_inputs(key, batch, input_size, hidden_size, output_size):
    kx, kw1, kb1, kw2, kb2 = jax.random.split(key, 5)
    x = jax.random.normal(kx, (batch, input_size), dtype=jnp.float32)
    lim1 = 1.0 / (input_size ** 0.5)
    lim2 = 1.0 / (hidden_size ** 0.5)
    w1 = jax.random.uniform(kw1, (input_size, hidden_size), jnp.float32, -lim1, lim1)
    b1 = jax.random.uniform(kb1, (hidden_size,), jnp.float32, -lim1, lim1)
    w2 = jax.random.uniform(kw2, (hidden_size, output_size), jnp.float32, -lim2, lim2)
    b2 = jax.random.uniform(kb2, (output_size,), jnp.float32, -lim2, lim2)
    return x, w1, b1, w2, b2


if __name__ == "__main__":
    k1, k2 = jax.random.split(jax.random.PRNGKey(0))

    # Config 1: SimpleDNN(input=32, hidden=64, output=16), batch=8 (single
    # grid step, fully resident single-buffered weights).
    x, w1, b1, w2, b2 = _make_inputs(k1, 8, 32, 64, 16)
    params, dims = prepare_simple_dnn_params(w1, b1, w2, b2)
    out = jax.block_until_ready(simple_dnn_forward(x, params, dims))
    ref = reference_forward(x, w1, b1, w2, b2)
    assert out.shape == (8, 16)
    # bf16 matmul inputs with f32 accumulation -> ~1e-3..1e-2 abs error here.
    assert jnp.allclose(out, ref, atol=2e-2, rtol=2e-2)

    # Config 2: exercises batch tiling (2 batch steps) and the hidden-dim
    # reduction axis with the f32 accumulator (tile_h=128 -> 3 H steps).
    x2, w1_2, b1_2, w2_2, b2_2 = _make_inputs(k2, 192, 256, 384, 48)
    params2, dims2 = prepare_simple_dnn_params(w1_2, b1_2, w2_2, b2_2)
    out2 = jax.block_until_ready(
        simple_dnn_forward(x2, params2, dims2, tile_h=128))
    ref2 = reference_forward(x2, w1_2, b1_2, w2_2, b2_2)
    assert out2.shape == (192, 48)
    assert jnp.allclose(out2, ref2, atol=5e-2, rtol=5e-2)

    print("KERNEL_OK")
</pallas_src>

<mosaic_0001>
module attributes {stable_mosaic.version = 11 : i64} {
  func.func @_simple_dnn_kernel(%arg0: i32, %arg1: i32, %arg2: memref<8x128xbf16, #tpu.memory_space<vmem>>, %arg3: memref<128x128xbf16, #tpu.memory_space<vmem>>, %arg4: memref<1x128xf32, #tpu.memory_space<vmem>>, %arg5: memref<128x128xbf16, #tpu.memory_space<vmem>>, %arg6: memref<1x128xf32, #tpu.memory_space<vmem>>, %arg7: memref<8x128xf32, #tpu.memory_space<vmem>>, %arg8: memref<8x128xf32, #tpu.memory_space<vmem>>) attributes {dimension_semantics = [#tpu.dimension_semantics<parallel>, #tpu.dimension_semantics<arbitrary>], iteration_bounds = array<i64: 1, 1>, scalar_prefetch = 0 : i64, scratch_operands = 1 : i64, tpu.core_type = #tpu.core_type<tc>, window_params = [{transform_indices = @transform_0, window_bounds = array<i64: 8, 128>}, {pipeline_mode = #tpu.pipeline_mode<synchronous>, transform_indices = @transform_1, window_bounds = array<i64: 128, 128>}, {pipeline_mode = #tpu.pipeline_mode<synchronous>, transform_indices = @transform_2, window_bounds = array<i64: 1, 128>}, {pipeline_mode = #tpu.pipeline_mode<synchronous>, transform_indices = @transform_3, window_bounds = array<i64: 128, 128>}, {pipeline_mode = #tpu.pipeline_mode<synchronous>, transform_indices = @transform_4, window_bounds = array<i64: 1, 128>}, {transform_indices = @transform_5, window_bounds = array<i64: 8, 128>}]} {
    %c0_i32 = arith.constant 0 : i32
    %0 = arith.cmpi eq, %arg1, %c0_i32 : i32
    %1 = arith.extui %0 : i1 to i32
    %c0_i32_0 = arith.constant 0 : i32
    %2 = arith.cmpi ne, %1, %c0_i32_0 : i32
    scf.if %2 {
      %cst_16 = arith.constant 0.000000e+00 : f32
      %20 = vector.broadcast %cst_16 : f32 to vector<8x128xf32>
      %c0_17 = arith.constant 0 : index
      %c0_18 = arith.constant 0 : index
      %21 = vector.load %arg8[%c0_17, %c0_18] : memref<8x128xf32, #tpu.memory_space<vmem>>, vector<8x128xf32>
      tpu.vector_store %arg8[%c0_17, %c0_18], %20 {strides = array<i32>} : memref<8x128xf32, #tpu.memory_space<vmem>>, vector<8x128xf32>,
    } else {
    }
    %c0 = arith.constant 0 : index
    %c0_1 = arith.constant 0 : index
    %3 = vector.load %arg2[%c0, %c0_1] : memref<8x128xbf16, #tpu.memory_space<vmem>>, vector<8x128xbf16>
    %c0_2 = arith.constant 0 : index
    %c0_3 = arith.constant 0 : index
    %4 = vector.load %arg3[%c0_2, %c0_3] : memref<128x128xbf16, #tpu.memory_space<vmem>>, vector<128x128xbf16>
    %cst = arith.constant dense<0.000000e+00> : vector<8x128xf32>
    %5 = tpu.matmul %3, %4, %cst {dimension_numbers = #tpu.dot_dimension_numbers<[1], [0], [0], [1], [0, 0, 1, 1], [], []>} : vector<8x128xbf16>, vector<128x128xbf16>, vector<8x128xf32> -> vector<8x128xf32>
    %c0_4 = arith.constant 0 : index
    %c0_5 = arith.constant 0 : index
    %6 = vector.load %arg4[%c0_4, %c0_5] : memref<1x128xf32, #tpu.memory_space<vmem>>, vector<1x128xf32>
    %7 = vector.broadcast %6 : vector<1x128xf32> to vector<8x128xf32>
    %8 = arith.addf %5, %7 : vector<8x128xf32>
    %cst_6 = arith.constant 0.000000e+00 : f32
    %9 = vector.broadcast %cst_6 : f32 to vector<8x128xf32>
    %10 = arith.maximumf %8, %9 : vector<8x128xf32>
    %c0_7 = arith.constant 0 : index
    %c0_8 = arith.constant 0 : index
    %11 = vector.load %arg8[%c0_7, %c0_8] : memref<8x128xf32, #tpu.memory_space<vmem>>, vector<8x128xf32>
    %12 = arith.truncf %10 : vector<8x128xf32> to vector<8x128xbf16>
    %c0_9 = arith.constant 0 : index
    %c0_10 = arith.constant 0 : index
    %13 = vector.load %arg5[%c0_9, %c0_10] : memref<128x128xbf16, #tpu.memory_space<vmem>>, vector<128x128xbf16>
    %cst_11 = arith.constant dense<0.000000e+00> : vector<8x128xf32>
    %14 = tpu.matmul %12, %13, %cst_11 {dimension_numbers = #tpu.dot_dimension_numbers<[1], [0], [0], [1], [0, 0, 1, 1], [], []>} : vector<8x128xbf16>, vector<128x128xbf16>, vector<8x128xf32> -> vector<8x128xf32>
    %15 = arith.addf %11, %14 : vector<8x128xf32>
    %c0_12 = arith.constant 0 : index
    %c0_13 = arith.constant 0 : index
    %16 = vector.load %arg8[%c0_12, %c0_13] : memref<8x128xf32, #tpu.memory_space<vmem>>, vector<8x128xf32>
    tpu.vector_store %arg8[%c0_12, %c0_13], %15 {strides = array<i32>} : memref<8x128xf32, #tpu.memory_space<vmem>>, vector<8x128xf32>,
    %c0_i32_14 = arith.constant 0 : i32
    %17 = arith.cmpi eq, %arg1, %c0_i32_14 : i32
    %18 = arith.extui %17 : i1 to i32
    %c0_i32_15 = arith.constant 0 : i32
    %19 = arith.cmpi ne, %18, %c0_i32_15 : i32
    scf.if %19 {
      %c0_16 = arith.constant 0 : index
      %c0_17 = arith.constant 0 : index
      %20 = vector.load %arg8[%c0_16, %c0_17] : memref<8x128xf32, #tpu.memory_space<vmem>>, vector<8x128xf32>
      %c0_18 = arith.constant 0 : index
      %c0_19 = arith.constant 0 : index
      %21 = vector.load %arg6[%c0_18, %c0_19] : memref<1x128xf32, #tpu.memory_space<vmem>>, vector<1x128xf32>
      %22 = vector.broadcast %21 : vector<1x128xf32> to vector<8x128xf32>
      %23 = arith.addf %20, %22 : vector<8x128xf32>
      %c0_20 = arith.constant 0 : index
      %c0_21 = arith.constant 0 : index
      %24 = vector.load %arg7[%c0_20, %c0_21] : memref<8x128xf32, #tpu.memory_space<vmem>>, vector<8x128xf32>
      tpu.vector_store %arg7[%c0_20, %c0_21], %23 {strides = array<i32>} : memref<8x128xf32, #tpu.memory_space<vmem>>, vector<8x128xf32>,
    } else {
    }
    return
  }
  func.func @transform_0(%arg0: i32, %arg1: i32) -> (i32, i32) {
    %c0_i32 = arith.constant 0 : i32
    %c0_i32_0 = arith.constant 0 : i32
    return %arg0, %c0_i32 : i32, i32
  }
  func.func @transform_1(%arg0: i32, %arg1: i32) -> (i32, i32) {
    %c0_i32 = arith.constant 0 : i32
    %c0_i32_0 = arith.constant 0 : i32
    return %c0_i32, %arg1 : i32, i32
  }
  func.func @transform_2(%arg0: i32, %arg1: i32) -> (i32, i32) {
    %c0_i32 = arith.constant 0 : i32
    %c0_i32_0 = arith.constant 0 : i32
    return %c0_i32, %arg1 : i32, i32
  }
  func.func @transform_3(%arg0: i32, %arg1: i32) -> (i32, i32) {
    %c0_i32 = arith.constant 0 : i32
    %c0_i32_0 = arith.constant 0 : i32
    return %arg1, %c0_i32 : i32, i32
  }
  func.func @transform_4(%arg0: i32, %arg1: i32) -> (i32, i32) {
    %c0_i32 = arith.constant 0 : i32
    %c0_i32_0 = arith.constant 0 : i32
    %c0_i32_1 = arith.constant 0 : i32
    return %c0_i32, %c0_i32_0 : i32, i32
  }
  func.func @transform_5(%arg0: i32, %arg1: i32) -> (i32, i32) {
    %c0_i32 = arith.constant 0 : i32
    %c0_i32_0 = arith.constant 0 : i32
    return %arg0, %c0_i32 : i32, i32
  }
}

</mosaic_0001>

<llo_original>
// kernel: simple_dnn_forward.1
$region0: #{simple_dnn_forward.1}
  #allocation0 [shape = 'u32[]', space=smem, size = 0x4, offset = 0x4, fixed_abs, tag = 'smem constant byte address 0x4 - core index']
  #allocation1 [shape = 'u32[144,128]{1,0:T(1,128)}', space=vmem, size = 0x12000, scoped, tag = 'internal scratch']
  #allocation2 [shape = 'f32[8,128]{1,0:T(8,128)}', space=vmem, size = 0x1000, scoped, tag = 'scratch operand']
  %s0 = inlined_call_operand.vmem [shape: bf16[8,128], index: 0, kind: input, shape index: {}]
  %s1 = inlined_call_operand.hbm [shape: bf16[128,128], index: 1, kind: input, shape index: {}]
  %s2 = inlined_call_operand.vmem [shape: f32[1,128], index: 2, kind: input, shape index: {}]
  %s3 = inlined_call_operand.hbm [shape: bf16[128,128], index: 3, kind: input, shape index: {}]
  %s4 = inlined_call_operand.vmem [shape: f32[1,128], index: 4, kind: input, shape index: {}]
  %s5 = inlined_call_operand.hbm [shape: f32[8,128], index: 5, kind: output, shape index: {}]
  %s6 = sld [smem:[#allocation0]]
  $region46: #{simple_dnn_forward.1} parent=0
    _
  %s8 = ssub.s32 1, %s6
  %s9 = scalar_select 0, %s8, %s6
  $region1: #{simple_dnn_forward.1} parent=0
    #allocation3 [shape = 'u8[32768]{0}', space=vmem, size = 0x8000, scoped, tag = 'input window, operand 1, single buffered']
    #allocation4 [shape = 's32[1]{0}', space=sflag, size = 0x4, scoped, tag = 'scoped memory for simple_dnn_forward.1']
    #allocation5 [shape = 's32[1]{0}', space=sflag, size = 0x4, scoped, tag = 'scoped memory for simple_dnn_forward.1']
    #allocation6 [shape = 'u8[32768]{0}', space=vmem, size = 0x8000, scoped, tag = 'input window, operand 3, single buffered']
    #allocation7 [shape = 's32[1]{0}', space=sflag, size = 0x4, scoped, tag = 'scoped memory for simple_dnn_forward.1']
    #allocation8 [shape = 'u8[4096]{0}', space=vmem, size = 0x1000, scoped, tag = 'output window, operand 0, single buffered']
    %10 = vsyncpa [#allocation4], 0
    %11 = vsyncpa [#allocation7], 0
    %12 = vsyncpa [#allocation5], 0
    // Predicated region
    $region2: #{simple_dnn_forward.1} parent=1 // pred_check
      _
    $region3: #{simple_dnn_forward.1} parent=1 // pred_check_branch
      %14 = sbr.rel (0) target = $region5
    $region4: #{simple_dnn_forward.1} parent=1 // pred_region
      _
    $region5: #{simple_dnn_forward.1} parent=1 // pred_fallthru
      _
    // Predicated region
    $region6: #{simple_dnn_forward.1} parent=1 // pred_check
      _
    $region7: #{simple_dnn_forward.1} parent=1 // pred_check_branch
      %16 = sbr.rel (0) target = $region9
    $region8: #{simple_dnn_forward.1} parent=1 // pred_region
      %s18 = ssub.s32 1024, 1024
      %19 = vsyncadd [#allocation4], %s18
      %s20 = sshll.u32 [#allocation3], 4
      %s21 = int_to_ptr.vmem [resolvable:$true] %s20
      %26 = dma.hbm_to_vmem [thread:$0]  %s1, 1024, %s21, [#allocation4], 64, 64, 4
    $region9: #{simple_dnn_forward.1} parent=1 // pred_fallthru
      _
    // Predicated region
    $region10: #{simple_dnn_forward.1} parent=1 // pred_check
      _
    $region11: #{simple_dnn_forward.1} parent=1 // pred_check_branch
      %28 = sbr.rel (0) target = $region13
    $region12: #{simple_dnn_forward.1} parent=1 // pred_region
      _
    $region13: #{simple_dnn_forward.1} parent=1 // pred_fallthru
      _
    // Predicated region
    $region14: #{simple_dnn_forward.1} parent=1 // pred_check
      _
    $region15: #{simple_dnn_forward.1} parent=1 // pred_check_branch
      %30 = sbr.rel (0) target = $region17
    $region16: #{simple_dnn_forward.1} parent=1 // pred_region
      %s32 = ssub.s32 1024, 1024
      %33 = vsyncadd [#allocation7], %s32
      %s34 = sshll.u32 [#allocation6], 4
      %s35 = int_to_ptr.vmem [resolvable:$true] %s34
      %40 = dma.hbm_to_vmem [thread:$0]  %s3, 1024, %s35, [#allocation7], 64, 64, 4
    $region17: #{simple_dnn_forward.1} parent=1 // pred_fallthru
      _
    // Predicated region
    $region18: #{simple_dnn_forward.1} parent=1 // pred_check
      _
    $region19: #{simple_dnn_forward.1} parent=1 // pred_check_branch
      %42 = sbr.rel (0) target = $region21
    $region20: #{simple_dnn_forward.1} parent=1 // pred_region
      _
    $region21: #{simple_dnn_forward.1} parent=1 // pred_fallthru
      _
    // Predicated region
    $region22: #{simple_dnn_forward.1} parent=1 // pred_check
      _
    $region23: #{simple_dnn_forward.1} parent=1 // pred_check_branch
      %44 = sbr.rel (0) target = $region25
    $region24: #{simple_dnn_forward.1} parent=1 // pred_region
      %45 = dma.done [#allocation4], 1024
    $region25: #{simple_dnn_forward.1} parent=1 // pred_fallthru
      _
    // Predicated region
    $region26: #{simple_dnn_forward.1} parent=1 // pred_check
      _
    $region27: #{simple_dnn_forward.1} parent=1 // pred_check_branch
      %47 = sbr.rel (0) target = $region29
    $region28: #{simple_dnn_forward.1} parent=1 // pred_region
      %48 = dma.done [#allocation7], 1024
    $region29: #{simple_dnn_forward.1} parent=1 // pred_fallthru
      _
    %p50 = scmp.eq.s32.totalorder 0, 0
    // Predicated region
    $region30: #{simple_dnn_forward.1} parent=1 // pred_check
      %p51 = pneg %p50
    $region31: #{simple_dnn_forward.1} parent=1 // pred_check_branch
      %53 = sbr.rel (%p51) target = $region33
    $region32: #{simple_dnn_forward.1} parent=1 // pred_region
      %54 = vst [vmem:[#allocation2] sm:$0xff] 0.0
    $region33: #{simple_dnn_forward.1} parent=1 // pred_fallthru
      _
    %v55 = vld [vmem:[%s0] sm:$0xf]
    %v56 = vld [vmem:[#allocation3] sm:$0xf]
    %v57 = vld [vmem:[#allocation3 + $0x4] sm:$0xf]
    %v58 = vld [vmem:[#allocation3 + $0x8] sm:$0xf]
    %v59 = vld [vmem:[#allocation3 + $0xc] sm:$0xf]
    %v60 = vld [vmem:[#allocation3 + $0x10] sm:$0xf]
    %v61 = vld [vmem:[#allocation3 + $0x14] sm:$0xf]
    %v62 = vld [vmem:[#allocation3 + $0x18] sm:$0xf]
    %v63 = vld [vmem:[#allocation3 + $0x1c] sm:$0xf]
    %v64 = vld [vmem:[#allocation3 + $0x20] sm:$0xf]
    %v65 = vld [vmem:[#allocation3 + $0x24] sm:$0xf]
    %v66 = vld [vmem:[#allocation3 + $0x28] sm:$0xf]
    %v67 = vld [vmem:[#allocation3 + $0x2c] sm:$0xf]
    %v68 = vld [vmem:[#allocation3 + $0x30] sm:$0xf]
    %v69 = vld [vmem:[#allocation3 + $0x34] sm:$0xf]
    %v70 = vld [vmem:[#allocation3 + $0x38] sm:$0xf]
    %v71 = vld [vmem:[#allocation3 + $0x3c] sm:$0xf]
    %v72 = vld [vmem:[%s2] sm:$0x1]
    %v74 = vlaneseq
    %v75 = vshrl.u32 %v74, 7
    %v76 = vsub.s32 0, %v75
    %v77 = vrot.slane %v72, %v76
    %v95 = vunpack.c.l.b16 %v56
    %v96 = vunpack.c.l.b16 %v57
    %v97 = vunpack.c.l.b16 %v58
    %v98 = vunpack.c.l.b16 %v59
    %v99 = vunpack.c.l.b16 %v60
    %v100 = vunpack.c.l.b16 %v61
    %v101 = vunpack.c.l.b16 %v62
    %v102 = vunpack.c.l.b16 %v63
    %v103 = vunpack.c.l.b16 %v64
    %v104 = vunpack.c.l.b16 %v65
    %v105 = vunpack.c.l.b16 %v66
    %v106 = vunpack.c.l.b16 %v67
    %v107 = vunpack.c.l.b16 %v68
    %v108 = vunpack.c.l.b16 %v69
    %v109 = vunpack.c.l.b16 %v70
    %v110 = vunpack.c.l.b16 %v71
    %v111 = vpack.c.b16 %v96, %v95
    %v112 = vpack.c.b16 %v98, %v97
    %v113 = vpack.c.b16 %v100, %v99
    %v114 = vpack.c.b16 %v102, %v101
    %v115 = vpack.c.b16 %v104, %v103
    %v116 = vpack.c.b16 %v106, %v105
    %v117 = vpack.c.b16 %v108, %v107
    %v118 = vpack.c.b16 %v110, %v109
    %127 = vmatprep.subr.bf16.mxu0 0
    %128 = vmatpush1.bf16.msra.mxu0 %v111
    %129 = vmatprep.subr.bf16.mxu0 0
    %130 = vmatpush1.bf16.msra.mxu0 %v112
    %131 = vmatprep.subr.bf16.mxu0 0
    %132 = vmatpush1.bf16.msra.mxu0 %v113
    %133 = vmatprep.subr.bf16.mxu0 0
    %134 = vmatpush1.bf16.msra.mxu0 %v114
    %135 = vmatprep.subr.bf16.mxu0 0
    %136 = vmatpush1.bf16.msra.mxu0 %v115
    %137 = vmatprep.subr.bf16.mxu0 0
    %138 = vmatpush1.bf16.msra.mxu0 %v116
    %139 = vmatprep.subr.bf16.mxu0 0
    %140 = vmatpush1.bf16.msra.mxu0 %v117
    %141 = vmatprep.subr.bf16.mxu0 0
    %142 = vmatpush1.bf16.msra.mxu0 %v118
    %143 = vmatprep.subr.bf16.mxu0 0
    %144 = vmatpush1.bf16.msra.mxu0 0
    %145 = vmatprep.subr.bf16.mxu0 0
    %146 = vmatpush1.bf16.msra.mxu0 0
    %147 = vmatprep.subr.bf16.mxu0 0
    %148 = vmatpush1.bf16.msra.mxu0 0
    %149 = vmatprep.subr.bf16.mxu0 0
    %150 = vmatpush1.bf16.msra.mxu0 0
    %151 = vmatprep.subr.bf16.mxu0 0
    %152 = vmatpush1.bf16.msra.mxu0 0
    %153 = vmatprep.subr.bf16.mxu0 0
    %154 = vmatpush1.bf16.msra.mxu0 0
    %155 = vmatprep.subr.bf16.mxu0 0
    %156 = vmatpush1.bf16.msra.mxu0 0
    %157 = vmatprep.subr.bf16.mxu0 0
    %158 = vmatpush1.bf16.msra.mxu0 0
    %159 = vmatprep.mubr.bf16.mxu0 0
    %160 = vmatmul.mubr.bf16.gmra.mrb[0].mxu0 %v55
    %v161 = vpop.f32.mrb[0].mxu0
    %v162 = vadd.f32 %v77, %v161
    %v163 = vpop.f32.mrb[0].mxu0
    %v164 = vpop.f32.mrb[0].mxu0
    %v165 = vpop.f32.mrb[0].mxu0
    %166 = vdwg.mxu0
    %v167 = vmax.f32 %v162, 0.0
    %v168 = vld [vmem:[#allocation2] sm:$0xff]
    %v169 = vpack.c.bf16 %v167, %v167
    %v170 = vld [vmem:[#allocation6] sm:$0xf]
    %v171 = vld [vmem:[#allocation6 + $0x4] sm:$0xf]
    %v172 = vld [vmem:[#allocation6 + $0x8] sm:$0xf]
    %v173 = vld [vmem:[#allocation6 + $0xc] sm:$0xf]
    %v174 = vld [vmem:[#allocation6 + $0x10] sm:$0xf]
    %v175 = vld [vmem:[#allocation6 + $0x14] sm:$0xf]
    %v176 = vld [vmem:[#allocation6 + $0x18] sm:$0xf]
    %v177 = vld [vmem:[#allocation6 + $0x1c] sm:$0xf]
    %v178 = vld [vmem:[#allocation6 + $0x20] sm:$0xf]
    %v179 = vld [vmem:[#allocation6 + $0x24] sm:$0xf]
    %v180 = vld [vmem:[#allocation6 + $0x28] sm:$0xf]
    %v181 = vld [vmem:[#allocation6 + $0x2c] sm:$0xf]
    %v182 = vld [vmem:[#allocation6 + $0x30] sm:$0xf]
    %v183 = vld [vmem:[#allocation6 + $0x34] sm:$0xf]
    %v184 = vld [vmem:[#allocation6 + $0x38] sm:$0xf]
    %v185 = vld [vmem:[#allocation6 + $0x3c] sm:$0xf]
    %v202 = vunpack.c.l.b16 %v170
    %v203 = vunpack.c.l.b16 %v171
    %v204 = vunpack.c.l.b16 %v172
    %v205 = vunpack.c.l.b16 %v173
    %v206 = vunpack.c.l.b16 %v174
    %v207 = vunpack.c.l.b16 %v175
    %v208 = vunpack.c.l.b16 %v176
    %v209 = vunpack.c.l.b16 %v177
    %v210 = vunpack.c.l.b16 %v178
    %v211 = vunpack.c.l.b16 %v179
    %v212 = vunpack.c.l.b16 %v180
    %v213 = vunpack.c.l.b16 %v181
    %v214 = vunpack.c.l.b16 %v182
    %v215 = vunpack.c.l.b16 %v183
    %v216 = vunpack.c.l.b16 %v184
    %v217 = vunpack.c.l.b16 %v185
    %v218 = vpack.c.b16 %v203, %v202
    %v219 = vpack.c.b16 %v205, %v204
    %v220 = vpack.c.b16 %v207, %v206
    %v221 = vpack.c.b16 %v209, %v208
    %v222 = vpack.c.b16 %v211, %v210
    %v223 = vpack.c.b16 %v213, %v212
    %v224 = vpack.c.b16 %v215, %v214
    %v225 = vpack.c.b16 %v217, %v216
    %234 = vmatprep.subr.bf16.mxu0 0
    %235 = vmatpush1.bf16.msra.mxu0 %v218
    %236 = vmatprep.subr.bf16.mxu0 0
    %237 = vmatpush1.bf16.msra.mxu0 %v219
    %238 = vmatprep.subr.bf16.mxu0 0
    %239 = vmatpush1.bf16.msra.mxu0 %v220
    %240 = vmatprep.subr.bf16.mxu0 0
    %241 = vmatpush1.bf16.msra.mxu0 %v221
    %242 = vmatprep.subr.bf16.mxu0 0
    %243 = vmatpush1.bf16.msra.mxu0 %v222
    %244 = vmatprep.subr.bf16.mxu0 0
    %245 = vmatpush1.bf16.msra.mxu0 %v223
    %246 = vmatprep.subr.bf16.mxu0 0
    %247 = vmatpush1.bf16.msra.mxu0 %v224
    %248 = vmatprep.subr.bf16.mxu0 0
    %249 = vmatpush1.bf16.msra.mxu0 %v225
    %250 = vmatprep.subr.bf16.mxu0 0
    %251 = vmatpush1.bf16.msra.mxu0 0
    %252 = vmatprep.subr.bf16.mxu0 0
    %253 = vmatpush1.bf16.msra.mxu0 0
    %254 = vmatprep.subr.bf16.mxu0 0
    %255 = vmatpush1.bf16.msra.mxu0 0
    %256 = vmatprep.subr.bf16.mxu0 0
    %257 = vmatpush1.bf16.msra.mxu0 0
    %258 = vmatprep.subr.bf16.mxu0 0
    %259 = vmatpush1.bf16.msra.mxu0 0
    %260 = vmatprep.subr.bf16.mxu0 0
    %261 = vmatpush1.bf16.msra.mxu0 0
    %262 = vmatprep.subr.bf16.mxu0 0
    %263 = vmatpush1.bf16.msra.mxu0 0
    %264 = vmatprep.subr.bf16.mxu0 0
    %265 = vmatpush1.bf16.msra.mxu0 0
    %266 = vmatprep.mubr.bf16.mxu0 0
    %267 = vmatmul.mubr.bf16.gmra.mrb[0].mxu0 %v169
    %v268 = vpop.f32.mrb[0].mxu0
    %v269 = vadd.f32 0.0, %v268
    %v270 = vpop.f32.mrb[0].mxu0
    %v271 = vpop.f32.mrb[0].mxu0
    %v272 = vpop.f32.mrb[0].mxu0
    %273 = vdwg.mxu0
    %v274 = vadd.f32 %v168, %v269
    %275 = vst [vmem:[#allocation2] sm:$0xff] %v274
    // Predicated region
    $region34: #{simple_dnn_forward.1} parent=1 // pred_check
      %p276 = pneg %p50
    $region35: #{simple_dnn_forward.1} parent=1 // pred_check_branch
      %278 = sbr.rel (%p276) target = $region37
    $region36: #{simple_dnn_forward.1} parent=1 // pred_region
      %v279 = vld [vmem:[#allocation2] sm:$0xff]
      %v280 = vld [vmem:[%s4] sm:$0x1]
      %v282 = vlaneseq
      %v283 = vshrl.u32 %v282, 7
      %v284 = vsub.s32 0, %v283
      %v285 = vrot.slane %v280, %v284
      %v287 = vadd.f32 %v279, %v285
      %288 = vst [vmem:[#allocation8] sm:$0xff] %v287
    $region37: #{simple_dnn_forward.1} parent=1 // pred_fallthru
      _
    // Predicated region
    $region38: #{simple_dnn_forward.1} parent=1 // pred_check
      _
    $region39: #{simple_dnn_forward.1} parent=1 // pred_check_branch
      %290 = sbr.rel (0) target = $region41
    $region40: #{simple_dnn_forward.1} parent=1 // pred_region
      %s292 = ssub.s32 128, 128
      %293 = vsyncadd [#allocation5], %s292
      %s295 = sshll.u32 [#allocation8], 4
      %s296 = int_to_ptr.vmem [resolvable:$true] %s295
      %298 = dma.vmem_to_hbm [thread:$0]  %s296, 128, %s5, [#allocation5]
    $region41: #{simple_dnn_forward.1} parent=1 // pred_fallthru
      _
    // Predicated region
    $region42: #{simple_dnn_forward.1} parent=1 // pred_check
      _
    $region43: #{simple_dnn_forward.1} parent=1 // pred_check_branch
      %300 = sbr.rel (0) target = $region45
    $region44: #{simple_dnn_forward.1} parent=1 // pred_region
      %301 = dma.done [#allocation5], 128
    $region45: #{simple_dnn_forward.1} parent=1 // pred_fallthru
      _
    %302 = vsyncpa [#allocation4], 1
    %303 = vsyncpa [#allocation7], 1
    %304 = vsyncpa [#allocation5], 1

</llo_original>
